<compile_context>
chip_gen: v5e
topology: v5e:2x2
jax: 0.10.0
libtpu: 0.0.40
codegen_flags: <defaults>
</compile_context>

<pallas_src>
import functools
import math

import jax
import jax.numpy as jnp
import numpy as np
from jax.experimental import pallas as pl
from jax.experimental.pallas import tpu as pltpu

SCORE_THRESH = 0.3  # cfg.RPN.SCORE_THRESH
_LOGIT_THRESH = math.log(SCORE_THRESH) - math.log1p(-SCORE_THRESH)  # logit(0.3)


def _round_up(x, m):
    return ((x + m - 1) // m) * m


def _pointrcnn_head_kernel(logit_thresh, weight_dtype,
                           feat_ref,   # (1, H, W)       seg-score map (C==1)
                           xy_ref,     # (1, 2, TILE_N)  grid coords in [-1,1], channel-major
                           pts_ref,    # (1, 1, TILE_N)  rpn point scores
                           xyz_ref,    # (1, 3, TILE_N)  backbone xyz, channel-major
                           out_ref):   # (1, 4, TILE_N)  packed [img, raw, seg, depth]
    Hi = feat_ref.shape[1]
    Wi = feat_ref.shape[2]

    feat = feat_ref[0]                                   # (H, W)
    xy = xy_ref[0].astype(jnp.float32)                   # (2, TILE_N)

    # grid_sample unnormalization (align_corners=False); stays in f32.
    ix = ((xy[0:1, :] + 1.0) * float(Wi) - 1.0) * 0.5    # (1, TILE_N) width coord
    iy = ((xy[1:2, :] + 1.0) * float(Hi) - 1.0) * 0.5    # (1, TILE_N) height coord

    col = jax.lax.broadcasted_iota(jnp.int32, (Wi, 1), 0).astype(jnp.float32)
    row = jax.lax.broadcasted_iota(jnp.int32, (Hi, 1), 0).astype(jnp.float32)

    # Separable bilinear "tent" weights: for integer pixel centers the bilinear
    # corner weight at column c is exactly max(0, 1 - |c - ix|) (likewise rows).
    # Out-of-image corners match no row/col, so zeros padding is implicit.
    wx = jnp.maximum(1.0 - jnp.abs(col - ix), 0.0)       # (W, TILE_N)
    wy = jnp.maximum(1.0 - jnp.abs(row - iy), 0.0)       # (H, TILE_N)

    # Stage 1: contract over W on the MXU -> (H, TILE_N).
    stage1 = jax.lax.dot_general(
        feat.astype(weight_dtype), wx.astype(weight_dtype),
        dimension_numbers=(((1,), (0,)), ((), ())),
        preferred_element_type=jnp.float32)

    # Stage 2: weight by wy and reduce over H (sublane reduce) -> (1, TILE_N).
    image_scores = jnp.sum(stage1 * wy, axis=0, keepdims=True)

    point_scores = pts_ref[0].astype(jnp.float32)        # (1, TILE_N)
    raw = image_scores + point_scores
    # sigmoid(raw) > t  <=>  raw > logit(t)
    seg = (raw > logit_thresh).astype(jnp.float32)

    xyz = xyz_ref[0].astype(jnp.float32)                 # (3, TILE_N)
    depth = jnp.sqrt(xyz[0:1, :] * xyz[0:1, :]
                     + xyz[1:2, :] * xyz[1:2, :]
                     + xyz[2:3, :] * xyz[2:3, :])

    # Single sublane-dense packed store: rows = [img, raw, seg, depth].
    out_ref[0] = jnp.concatenate([image_scores, raw, seg, depth], axis=0)


def pointrcnn_scoring_head(rpn_image_seg, l_xy_cor, rpn_cls, backbone_xyz,
                           *, tile_n=512, weight_dtype=jnp.float32):
    """Fused PointRCNN scoring head.

    rpn_image_seg: (B, C, H, W)   (C == 1, NCHW as in PyTorch)
    l_xy_cor:      (B, N, 2)      grid coords in [-1, 1]
    rpn_cls:       (B, N, 1)
    backbone_xyz:  (B, N, 3)
    weight_dtype:  dtype of the MXU matmul operands (bf16 pays off on v6e/v7x;
                   coordinate math always stays f32).
    """
    B, C, H, W = rpn_image_seg.shape
    assert C == 1, "rpn_image_seg is a single-channel seg-score map"
    N = l_xy_cor.shape[1]

    tile_n = min(_round_up(tile_n, 128), _round_up(N, 128))
    n_pad = _round_up(N, tile_n)
    # Make sure both TensorCores get parallel work on megacore parts (v7x).
    if B * (n_pad // tile_n) < 2 and tile_n > 128:
        tile_n = max(128, _round_up(n_pad // 2, 128))
        n_pad = _round_up(N, tile_n)

    feat = rpn_image_seg.reshape(B, H, W)                      # keep source dtype
    xy = jnp.transpose(l_xy_cor, (0, 2, 1))                    # (B, 2, N)
    pts = jnp.transpose(rpn_cls[:, :, 0:1], (0, 2, 1))         # (B, 1, N)
    xyz = jnp.transpose(backbone_xyz, (0, 2, 1))               # (B, 3, N)
    if n_pad != N:
        dn = n_pad - N
        pad = ((0, 0), (0, 0), (0, dn))
        xy = jnp.pad(xy, pad)
        pts = jnp.pad(pts, pad)
        xyz = jnp.pad(xyz, pad)

    grid = (B, n_pad // tile_n)
    bn_spec = lambda rows: pl.BlockSpec((1, rows, tile_n), lambda b, n: (b, 0, n))

    kernel = functools.partial(_pointrcnn_head_kernel,
                               float(_LOGIT_THRESH), weight_dtype)
    packed = pl.pallas_call(
        kernel,
        out_shape=jax.ShapeDtypeStruct((B, 4, n_pad), jnp.float32),
        grid=grid,
        in_specs=[
            # Seg map: index_map independent of n -> VMEM-resident per batch,
            # DMA'd only B times total.
            pl.BlockSpec((1, H, W), lambda b, n: (b, 0, 0)),
            bn_spec(2),   # xy
            bn_spec(1),   # point scores
            bn_spec(3),   # xyz
        ],
        out_specs=bn_spec(4),
        compiler_params=pltpu.CompilerParams(
            dimension_semantics=("parallel", "parallel"),
            vmem_limit_bytes=32 * 1024 * 1024),
    )(feat, xy, pts, xyz)

    img = packed[:, 0, :N]
    raw = packed[:, 1, :N]
    seg = packed[:, 2, :N]
    depth = packed[:, 3, :N]

    return {
        "rpn_image_scores": img,
        "rpn_point_scores": rpn_cls[:, :, 0],   # passthrough, no kernel round trip
        "rpn_scores_raw": raw,
        "seg_result": seg,
        "pts_depth": depth,
    }


# ------------------------ pure-JAX reference (for checking) ------------------
def _grid_sample_ref(feat, xy):
    """torch.nn.functional.grid_sample(feat, xy[:, None]) semantics (bilinear,
    zeros padding, align_corners=False), returning (B, C, N)."""
    B, C, H, W = feat.shape
    gx, gy = xy[..., 0], xy[..., 1]
    ix = ((gx + 1.0) * W - 1.0) * 0.5
    iy = ((gy + 1.0) * H - 1.0) * 0.5
    x0 = jnp.floor(ix).astype(jnp.int32)
    x1 = x0 + 1
    y0 = jnp.floor(iy).astype(jnp.int32)
    y1 = y0 + 1
    wx1 = ix - x0
    wx0 = 1.0 - wx1
    wy1 = iy - y0
    wy0 = 1.0 - wy1

    bidx = jnp.arange(B)[:, None, None]
    cidx = jnp.arange(C)[None, :, None]

    def gather(xc, yc):
        valid = (xc >= 0) & (xc < W) & (yc >= 0) & (yc < H)
        xcc = jnp.clip(xc, 0, W - 1)
        ycc = jnp.clip(yc, 0, H - 1)
        vals = feat[bidx, cidx, ycc[:, None, :], xcc[:, None, :]]   # (B, C, N)
        return vals * valid[:, None, :].astype(feat.dtype)

    return (gather(x0, y0) * (wx0 * wy0)[:, None, :]
            + gather(x1, y0) * (wx1 * wy0)[:, None, :]
            + gather(x0, y1) * (wx0 * wy1)[:, None, :]
            + gather(x1, y1) * (wx1 * wy1)[:, None, :])


if __name__ == "__main__":
    # Shapes chosen so the (B, N-tile) grid, the resident-seg-map reuse across
    # n-tiles, and the N padding path are all exercised.
    B, C, H, W, N = 2, 1, 12, 16, 200

    key = jax.random.PRNGKey(0)
    k1, k2, k3, k4 = jax.random.split(key, 4)
    rpn_image_seg = jax.random.normal(k1, (B, C, H, W), dtype=jnp.float32)
    # slightly outside [-1, 1] to exercise the zeros padding path
    l_xy_cor = jax.random.uniform(k2, (B, N, 2), minval=-1.1, maxval=1.1,
                                  dtype=jnp.float32)
    rpn_cls = jax.random.normal(k3, (B, N, 1), dtype=jnp.float32)
    backbone_xyz = jax.random.normal(k4, (B, N, 3), dtype=jnp.float32)

    out = pointrcnn_scoring_head(rpn_image_seg, l_xy_cor, rpn_cls, backbone_xyz,
                                 tile_n=128)
    out = jax.block_until_ready(out)

    # reference check
    img_ref = _grid_sample_ref(rpn_image_seg, l_xy_cor)[:, 0, :]
    pnt_ref = rpn_cls[:, :, 0]
    raw_ref = img_ref + pnt_ref
    seg_ref = (jax.nn.sigmoid(raw_ref) > SCORE_THRESH).astype(jnp.float32)
    depth_ref = jnp.linalg.norm(backbone_xyz, axis=2)

    np.testing.assert_allclose(out["rpn_image_scores"], img_ref, atol=1e-5, rtol=1e-5)
    np.testing.assert_allclose(out["rpn_point_scores"], pnt_ref, atol=1e-6, rtol=1e-6)
    np.testing.assert_allclose(out["rpn_scores_raw"], raw_ref, atol=1e-5, rtol=1e-5)
    np.testing.assert_allclose(out["pts_depth"], depth_ref, atol=1e-5, rtol=1e-5)

    # seg_result: exact except (measure-zero) values sitting right at the
    # sigmoid threshold, where float noise between kernel/reference may flip.
    seg_out = np.asarray(out["seg_result"])
    near_thresh = np.abs(np.asarray(raw_ref) - _LOGIT_THRESH) < 1e-4
    mismatch = seg_out != np.asarray(seg_ref)
    assert not np.any(mismatch & ~near_thresh), "seg_result mismatch away from threshold"

    print("KERNEL_OK")
</pallas_src>

<mosaic_0001>
module attributes {stable_mosaic.version = 11 : i64} {
  func.func @_pointrcnn_head_kernel(%arg0: i32, %arg1: i32, %arg2: memref<1x12x16xf32, #tpu.memory_space<vmem>>, %arg3: memref<1x2x128xf32, #tpu.memory_space<vmem>>, %arg4: memref<1x1x128xf32, #tpu.memory_space<vmem>>, %arg5: memref<1x3x128xf32, #tpu.memory_space<vmem>>, %arg6: memref<1x4x128xf32, #tpu.memory_space<vmem>>) attributes {dimension_semantics = [#tpu.dimension_semantics<parallel>, #tpu.dimension_semantics<parallel>], iteration_bounds = array<i64: 2, 2>, scalar_prefetch = 0 : i64, scratch_operands = 0 : i64, tpu.core_type = #tpu.core_type<tc>, window_params = [{transform_indices = @transform_0, window_bounds = array<i64: 1, 12, 16>}, {transform_indices = @transform_1, window_bounds = array<i64: 1, 2, 128>}, {transform_indices = @transform_2, window_bounds = array<i64: 1, 1, 128>}, {transform_indices = @transform_3, window_bounds = array<i64: 1, 3, 128>}, {transform_indices = @transform_4, window_bounds = array<i64: 1, 4, 128>}]} {
    %c0 = arith.constant 0 : index
    %c0_0 = arith.constant 0 : index
    %c0_1 = arith.constant 0 : index
    %0 = vector.load %arg2[%c0, %c0_0, %c0_1] : memref<1x12x16xf32, #tpu.memory_space<vmem>>, vector<1x12x16xf32>
    %1 = vector.shape_cast %0 : vector<1x12x16xf32> to vector<12x16xf32>
    %c0_2 = arith.constant 0 : index
    %c0_3 = arith.constant 0 : index
    %c0_4 = arith.constant 0 : index
    %2 = vector.load %arg3[%c0_2, %c0_3, %c0_4] : memref<1x2x128xf32, #tpu.memory_space<vmem>>, vector<1x2x128xf32>
    %3 = vector.shape_cast %2 : vector<1x2x128xf32> to vector<2x128xf32>
    %4 = vector.extract_strided_slice %3 {offsets = [0, 0], sizes = [1, 128], strides = [1, 1]} : vector<2x128xf32> to vector<1x128xf32>
    %cst = arith.constant 1.000000e+00 : f32
    %5 = vector.broadcast %cst : f32 to vector<1x128xf32>
    %6 = arith.addf %4, %5 : vector<1x128xf32>
    %cst_5 = arith.constant 1.600000e+01 : f32
    %7 = vector.broadcast %cst_5 : f32 to vector<1x128xf32>
    %8 = arith.mulf %6, %7 : vector<1x128xf32>
    %cst_6 = arith.constant 1.000000e+00 : f32
    %9 = vector.broadcast %cst_6 : f32 to vector<1x128xf32>
    %10 = arith.subf %8, %9 : vector<1x128xf32>
    %cst_7 = arith.constant 5.000000e-01 : f32
    %11 = vector.broadcast %cst_7 : f32 to vector<1x128xf32>
    %12 = arith.mulf %10, %11 : vector<1x128xf32>
    %13 = vector.extract_strided_slice %3 {offsets = [1, 0], sizes = [1, 128], strides = [1, 1]} : vector<2x128xf32> to vector<1x128xf32>
    %cst_8 = arith.constant 1.000000e+00 : f32
    %14 = vector.broadcast %cst_8 : f32 to vector<1x128xf32>
    %15 = arith.addf %13, %14 : vector<1x128xf32>
    %cst_9 = arith.constant 1.200000e+01 : f32
    %16 = vector.broadcast %cst_9 : f32 to vector<1x128xf32>
    %17 = arith.mulf %15, %16 : vector<1x128xf32>
    %cst_10 = arith.constant 1.000000e+00 : f32
    %18 = vector.broadcast %cst_10 : f32 to vector<1x128xf32>
    %19 = arith.subf %17, %18 : vector<1x128xf32>
    %cst_11 = arith.constant 5.000000e-01 : f32
    %20 = vector.broadcast %cst_11 : f32 to vector<1x128xf32>
    %21 = arith.mulf %19, %20 : vector<1x128xf32>
    %22 = tpu.iota {dimensions = array<i32: 0>} : vector<16x1xi32>
    %23 = arith.sitofp %22 : vector<16x1xi32> to vector<16x1xf32>
    %24 = tpu.iota {dimensions = array<i32: 0>} : vector<12x1xi32>
    %25 = arith.sitofp %24 : vector<12x1xi32> to vector<12x1xf32>
    %26 = vector.broadcast %23 : vector<16x1xf32> to vector<16x128xf32>
    %27 = vector.broadcast %12 : vector<1x128xf32> to vector<16x128xf32>
    %28 = arith.subf %26, %27 : vector<16x128xf32>
    %29 = math.absf %28 : vector<16x128xf32>
    %cst_12 = arith.constant 1.000000e+00 : f32
    %30 = vector.broadcast %cst_12 : f32 to vector<16x128xf32>
    %31 = arith.subf %30, %29 : vector<16x128xf32>
    %cst_13 = arith.constant 0.000000e+00 : f32
    %32 = vector.broadcast %cst_13 : f32 to vector<16x128xf32>
    %33 = arith.maximumf %31, %32 : vector<16x128xf32>
    %34 = vector.broadcast %25 : vector<12x1xf32> to vector<12x128xf32>
    %35 = vector.broadcast %21 : vector<1x128xf32> to vector<12x128xf32>
    %36 = arith.subf %34, %35 : vector<12x128xf32>
    %37 = math.absf %36 : vector<12x128xf32>
    %cst_14 = arith.constant 1.000000e+00 : f32
    %38 = vector.broadcast %cst_14 : f32 to vector<12x128xf32>
    %39 = arith.subf %38, %37 : vector<12x128xf32>
    %cst_15 = arith.constant 0.000000e+00 : f32
    %40 = vector.broadcast %cst_15 : f32 to vector<12x128xf32>
    %41 = arith.maximumf %39, %40 : vector<12x128xf32>
    %cst_16 = arith.constant dense<0.000000e+00> : vector<12x128xf32>
    %42 = tpu.matmul %1, %33, %cst_16 {dimension_numbers = #tpu.dot_dimension_numbers<[1], [0], [0], [1], [0, 0, 1, 1], [], []>} : vector<12x16xf32>, vector<16x128xf32>, vector<12x128xf32> -> vector<12x128xf32>
    %43 = arith.mulf %42, %41 : vector<12x128xf32>
    %cst_17 = arith.constant dense<0.000000e+00> : vector<128xf32>
    %44 = vector.multi_reduction <add>, %43, %cst_17 [0] : vector<12x128xf32> to vector<128xf32>
    %45 = vector.shape_cast %44 : vector<128xf32> to vector<1x128xf32>
    %c0_18 = arith.constant 0 : index
    %c0_19 = arith.constant 0 : index
    %c0_20 = arith.constant 0 : index
    %46 = vector.load %arg4[%c0_18, %c0_19, %c0_20] : memref<1x1x128xf32, #tpu.memory_space<vmem>>, vector<1x1x128xf32>
    %47 = vector.shape_cast %46 : vector<1x1x128xf32> to vector<1x128xf32>
    %48 = arith.addf %45, %47 : vector<1x128xf32>
    %cst_21 = arith.constant -0.847297847 : f32
    %49 = vector.broadcast %cst_21 : f32 to vector<1x128xf32>
    %50 = arith.cmpf ogt, %48, %49 : vector<1x128xf32>
    %51 = arith.extui %50 : vector<1x128xi1> to vector<1x128xi32>
    %52 = arith.sitofp %51 : vector<1x128xi32> to vector<1x128xf32>
    %c0_22 = arith.constant 0 : index
    %c0_23 = arith.constant 0 : index
    %c0_24 = arith.constant 0 : index
    %53 = vector.load %arg5[%c0_22, %c0_23, %c0_24] : memref<1x3x128xf32, #tpu.memory_space<vmem>>, vector<1x3x128xf32>
    %54 = vector.shape_cast %53 : vector<1x3x128xf32> to vector<3x128xf32>
    %55 = vector.extract_strided_slice %54 {offsets = [0, 0], sizes = [1, 128], strides = [1, 1]} : vector<3x128xf32> to vector<1x128xf32>
    %56 = vector.extract_strided_slice %54 {offsets = [0, 0], sizes = [1, 128], strides = [1, 1]} : vector<3x128xf32> to vector<1x128xf32>
    %57 = arith.mulf %55, %56 : vector<1x128xf32>
    %58 = vector.extract_strided_slice %54 {offsets = [1, 0], sizes = [1, 128], strides = [1, 1]} : vector<3x128xf32> to vector<1x128xf32>
    %59 = vector.extract_strided_slice %54 {offsets = [1, 0], sizes = [1, 128], strides = [1, 1]} : vector<3x128xf32> to vector<1x128xf32>
    %60 = arith.mulf %58, %59 : vector<1x128xf32>
    %61 = arith.addf %57, %60 : vector<1x128xf32>
    %62 = vector.extract_strided_slice %54 {offsets = [2, 0], sizes = [1, 128], strides = [1, 1]} : vector<3x128xf32> to vector<1x128xf32>
    %63 = vector.extract_strided_slice %54 {offsets = [2, 0], sizes = [1, 128], strides = [1, 1]} : vector<3x128xf32> to vector<1x128xf32>
    %64 = arith.mulf %62, %63 : vector<1x128xf32>
    %65 = arith.addf %61, %64 : vector<1x128xf32>
    %66 = math.sqrt %65 : vector<1x128xf32>
    %67 = tpu.concatenate %45, %48, %52, %66 in 0 : vector<1x128xf32>, vector<1x128xf32>, vector<1x128xf32>, vector<1x128xf32> -> vector<4x128xf32>
    %c0_25 = arith.constant 0 : index
    %c0_26 = arith.constant 0 : index
    %c0_27 = arith.constant 0 : index
    %68 = vector.load %arg6[%c0_25, %c0_26, %c0_27] : memref<1x4x128xf32, #tpu.memory_space<vmem>>, vector<1x4x128xf32>
    %69 = vector.shape_cast %68 : vector<1x4x128xf32> to vector<4x128xf32>
    %70 = vector.shape_cast %67 : vector<4x128xf32> to vector<1x4x128xf32>
    tpu.vector_store %arg6[%c0_25, %c0_26, %c0_27], %70 {strides = array<i32>} : memref<1x4x128xf32, #tpu.memory_space<vmem>>, vector<1x4x128xf32>,
    return
  }
  func.func @transform_0(%arg0: i32, %arg1: i32) -> (i32, i32, i32) {
    %c0_i32 = arith.constant 0 : i32
    %c0_i32_0 = arith.constant 0 : i32
    %c0_i32_1 = arith.constant 0 : i32
    return %arg0, %c0_i32, %c0_i32_0 : i32, i32, i32
  }
  func.func @transform_1(%arg0: i32, %arg1: i32) -> (i32, i32, i32) {
    %c0_i32 = arith.constant 0 : i32
    %c0_i32_0 = arith.constant 0 : i32
    return %arg0, %c0_i32, %arg1 : i32, i32, i32
  }
  func.func @transform_2(%arg0: i32, %arg1: i32) -> (i32, i32, i32) {
    %c0_i32 = arith.constant 0 : i32
    %c0_i32_0 = arith.constant 0 : i32
    return %arg0, %c0_i32, %arg1 : i32, i32, i32
  }
  func.func @transform_3(%arg0: i32, %arg1: i32) -> (i32, i32, i32) {
    %c0_i32 = arith.constant 0 : i32
    %c0_i32_0 = arith.constant 0 : i32
    return %arg0, %c0_i32, %arg1 : i32, i32, i32
  }
  func.func @transform_4(%arg0: i32, %arg1: i32) -> (i32, i32, i32) {
    %c0_i32 = arith.constant 0 : i32
    %c0_i32_0 = arith.constant 0 : i32
    return %arg0, %c0_i32, %arg1 : i32, i32, i32
  }
}

</mosaic_0001>

<llo_original>
// kernel: tpu_custom_call.1
$region0: #{tpu_custom_call.1}
  #allocation0 [shape = 'u32[]', space=smem, size = 0x4, offset = 0x4, fixed_abs, tag = 'smem constant byte address 0x4 - core index']
  #allocation1 [shape = 'u32[72,128]{1,0:T(1,128)}', space=vmem, size = 0x9000, scoped, tag = 'internal scratch']
  %s0 = inlined_call_operand.vmem [shape: f32[2,12,16], index: 0, kind: input, shape index: {}]
  %s1 = inlined_call_operand.vmem [shape: f32[2,2,256], index: 1, kind: input, shape index: {}]
  %s2 = inlined_call_operand.vmem [shape: f32[2,1,256], index: 2, kind: input, shape index: {}]
  %s3 = inlined_call_operand.vmem [shape: f32[2,3,256], index: 3, kind: input, shape index: {}]
  %s4 = inlined_call_operand.hbm [shape: f32[2,4,256], index: 4, kind: output, shape index: {}]
  %s5 = sld [smem:[#allocation0]]
  $region49: #{tpu_custom_call.1} parent=0
    _
  %s7 = ssub.s32 1, %s5
  %s8 = scalar_select 0, %s7, %s5
  $region1: #{tpu_custom_call.1} parent=0
    #allocation2 [shape = 'u8[4096]{0}', space=vmem, size = 0x1000, scoped, tag = 'output window, operand 0']
    #allocation3 [shape = 's32[2]{0}', space=sflag, size = 0x8, scoped, tag = 'scoped memory for tpu_custom_call.1']
    %9 = vsyncpa [#allocation3], 0
    %s10 = scalar_lea.sflag [#allocation3], 1
    %11 = vsyncpa %s10, 0
    loop: start=0, step=1, limit=6
    $region2: #{tpu_custom_call.1} parent=1 // loop_pre_header
      _
    $region3: #{tpu_custom_call.1} parent=1 // loop_header
      %s13 = sphi 0, %s17
      %p14 = scmp.ge.s32.totalorder %s13, 6
      %s20 = sphi 0, %s32
      %s21 = sphi 0, %s28
      %s22 = sphi 0, %s20
      %s23 = sphi 0, %s21
      %s24 = sphi 0, %s22
      %s25 = sphi 0, %s23
      %s35 = sphi 0, %s37
      %s38 = sphi 0, %s35
      %s39 = sphi 0, %s38
      %s55 = sphi 0, %s39
      %s63 = sphi 0, %s65
      %s66 = sphi 0, %s63
      %s67 = sphi 0, %s66
      %s83 = sphi 0, %s67
      %s91 = sphi 0, %s93
      %s94 = sphi 0, %s91
      %s95 = sphi 0, %s94
      %s111 = sphi 0, %s95
      %s119 = sphi 0, %s121
      %s122 = sphi 0, %s119
      %s123 = sphi 0, %s122
      %s139 = sphi 0, %s123
      %s147 = sphi 0, %s149
      %s150 = sphi 0, %s147
      %s151 = sphi 0, %s150
      %s167 = sphi 0, %s151
    $region4: #{tpu_custom_call.1} parent=1 // loop_header_branch
      %16 = sbr.rel (%p14) target = $region8
    $region5: #{tpu_custom_call.1} parent=1 // loop_body
      %s18 = ssub.s32 %s13, 1
      %s19 = ssub.s32 %s13, 2
      %s26 = sadd.s32 1, %s21
      %p27 = scmp.ge.s32.totalorder %s26, 2
      %s28 = scalar_select %p27, 0, %s26
      %s29 = sadd.s32 1, %s20
      %s30 = scalar_select %p27, %s29, %s20
      %p31 = scmp.ge.s32.totalorder %s30, 2
      %s32 = scalar_select %p31, 0, %s30
      %s33 = ssub.s32 %s20, %s32
      %p34 = scmp.eq.s32.totalorder %s33, 0
      %s36 = sadd.s32 %s35, 1
      %s37 = scalar_select %p34, %s35, %s36
      %p40 = pneg %p34
      %p41 = scmp.eq.s32.totalorder %s13, 3
      %p42 = por %p40, %p41
      %p43 = scmp.ne.s32.totalorder %s35, %s38
      %p44 = scmp.eq.s32.totalorder %s13, 0
      %p45 = por %p43, %p44
      %p46 = scmp.ne.s32.totalorder %s35, %s38
      %p47 = scmp.eq.s32.totalorder %s18, 3
      %p48 = por %p46, %p47
      %p49 = scmp.ne.s32.totalorder %s38, %s39
      %p50 = scmp.eq.s32.totalorder %s18, 0
      %p51 = por %p49, %p50
      %p52 = scmp.ne.s32.totalorder %s38, %s39
      %p53 = scmp.eq.s32.totalorder %s19, 3
      %p54 = por %p52, %p53
      %p56 = scmp.ne.s32.totalorder %s39, %s55
      %p57 = scmp.eq.s32.totalorder %s19, 0
      %p58 = por %p56, %p57
      %s59 = ssub.s32 %s20, %s32
      %s60 = ssub.s32 %s21, %s28
      %s61 = sor.u32 %s59, %s60
      %p62 = scmp.eq.s32.totalorder %s61, 0
      %s64 = sadd.s32 %s63, 1
      %s65 = scalar_select %p62, %s63, %s64
      %p68 = pneg %p62
      %p69 = scmp.eq.s32.totalorder %s13, 3
      %p70 = por %p68, %p69
      %p71 = scmp.ne.s32.totalorder %s63, %s66
      %p72 = scmp.eq.s32.totalorder %s13, 0
      %p73 = por %p71, %p72
      %p74 = scmp.ne.s32.totalorder %s63, %s66
      %p75 = scmp.eq.s32.totalorder %s18, 3
      %p76 = por %p74, %p75
      %p77 = scmp.ne.s32.totalorder %s66, %s67
      %p78 = scmp.eq.s32.totalorder %s18, 0
      %p79 = por %p77, %p78
      %p80 = scmp.ne.s32.totalorder %s66, %s67
      %p81 = scmp.eq.s32.totalorder %s19, 3
      %p82 = por %p80, %p81
      %p84 = scmp.ne.s32.totalorder %s67, %s83
      %p85 = scmp.eq.s32.totalorder %s19, 0
      %p86 = por %p84, %p85
      %s87 = ssub.s32 %s20, %s32
      %s88 = ssub.s32 %s21, %s28
      %s89 = sor.u32 %s87, %s88
      %p90 = scmp.eq.s32.totalorder %s89, 0
      %s92 = sadd.s32 %s91, 1
      %s93 = scalar_select %p90, %s91, %s92
      %p96 = pneg %p90
      %p97 = scmp.eq.s32.totalorder %s13, 3
      %p98 = por %p96, %p97
      %p99 = scmp.ne.s32.totalorder %s91, %s94
      %p100 = scmp.eq.s32.totalorder %s13, 0
      %p101 = por %p99, %p100
      %p102 = scmp.ne.s32.totalorder %s91, %s94
      %p103 = scmp.eq.s32.totalorder %s18, 3
      %p104 = por %p102, %p103
      %p105 = scmp.ne.s32.totalorder %s94, %s95
      %p106 = scmp.eq.s32.totalorder %s18, 0
      %p107 = por %p105, %p106
      %p108 = scmp.ne.s32.totalorder %s94, %s95
      %p109 = scmp.eq.s32.totalorder %s19, 3
      %p110 = por %p108, %p109
      %p112 = scmp.ne.s32.totalorder %s95, %s111
      %p113 = scmp.eq.s32.totalorder %s19, 0
      %p114 = por %p112, %p113
      %s115 = ssub.s32 %s20, %s32
      %s116 = ssub.s32 %s21, %s28
      %s117 = sor.u32 %s115, %s116
      %p118 = scmp.eq.s32.totalorder %s117, 0
      %s120 = sadd.s32 %s119, 1
      %s121 = scalar_select %p118, %s119, %s120
      %p124 = pneg %p118
      %p125 = scmp.eq.s32.totalorder %s13, 3
      %p126 = por %p124, %p125
      %p127 = scmp.ne.s32.totalorder %s119, %s122
      %p128 = scmp.eq.s32.totalorder %s13, 0
      %p129 = por %p127, %p128
      %p130 = scmp.ne.s32.totalorder %s119, %s122
      %p131 = scmp.eq.s32.totalorder %s18, 3
      %p132 = por %p130, %p131
      %p133 = scmp.ne.s32.totalorder %s122, %s123
      %p134 = scmp.eq.s32.totalorder %s18, 0
      %p135 = por %p133, %p134
      %p136 = scmp.ne.s32.totalorder %s122, %s123
      %p137 = scmp.eq.s32.totalorder %s19, 3
      %p138 = por %p136, %p137
      %p140 = scmp.ne.s32.totalorder %s123, %s139
      %p141 = scmp.eq.s32.totalorder %s19, 0
      %p142 = por %p140, %p141
      %s143 = ssub.s32 %s20, %s32
      %s144 = ssub.s32 %s21, %s28
      %s145 = sor.u32 %s143, %s144
      %p146 = scmp.eq.s32.totalorder %s145, 0
      %s148 = sadd.s32 %s147, 1
      %s149 = scalar_select %p146, %s147, %s148
      %p152 = pneg %p146
      %p153 = scmp.eq.s32.totalorder %s13, 3
      %p154 = por %p152, %p153
      %p155 = scmp.ne.s32.totalorder %s147, %s150
      %p156 = scmp.eq.s32.totalorder %s13, 0
      %p157 = por %p155, %p156
      %p158 = scmp.ne.s32.totalorder %s147, %s150
      %p159 = scmp.eq.s32.totalorder %s18, 3
      %p160 = por %p158, %p159
      %p161 = scmp.ne.s32.totalorder %s150, %s151
      %p162 = scmp.eq.s32.totalorder %s18, 0
      %p163 = por %p161, %p162
      %p164 = scmp.ne.s32.totalorder %s150, %s151
      %p165 = scmp.eq.s32.totalorder %s19, 3
      %p166 = por %p164, %p165
      %p168 = scmp.ne.s32.totalorder %s151, %s167
      %p169 = scmp.eq.s32.totalorder %s19, 0
      %p170 = por %p168, %p169
      %p171 = scmp.le.s32.totalorder 1, %s13
      %p172 = scmp.lt.s32.totalorder %s13, 5
      %p173 = pnand %p171, %p172
      %p174 = pneg %p173
      // Predicated region
      $region9: #{tpu_custom_call.1} parent=5 // pred_check
        _
      $region10: #{tpu_custom_call.1} parent=5 // pred_check_branch
        %176 = sbr.rel (%p173) target = $region12
      $region11: #{tpu_custom_call.1} parent=5 // pred_region
        %s177 = ssub.s32 %s13, 1
      $region12: #{tpu_custom_call.1} parent=5 // pred_fallthru
        _
      %p178 = scmp.lt.s32.totalorder %s13, 4
      // Predicated region
      $region13: #{tpu_custom_call.1} parent=5 // pred_check
        %p179 = pneg %p178
      $region14: #{tpu_custom_call.1} parent=5 // pred_check_branch
        %181 = sbr.rel (%p179) target = $region16
      $region15: #{tpu_custom_call.1} parent=5 // pred_region
        // Predicated region
        $region17: #{tpu_custom_call.1} parent=15 // pred_check
          %p182 = pneg %p45
        $region18: #{tpu_custom_call.1} parent=15 // pred_check_branch
          %184 = sbr.rel (%p182) target = $region20
        $region19: #{tpu_custom_call.1} parent=15 // pred_region
          %p185 = scmp.lt.s32.totalorder %s20, 1
          %s186 = scalar_select %p185, %s20, 1
          %s187 = smul.addr %s186, 2
          %s188 = smul.addr %s187, 8
          %s189 = scalar_lea.vmem %s0, %s188
        $region20: #{tpu_custom_call.1} parent=15 // pred_fallthru
          _
        // Predicated region
        $region21: #{tpu_custom_call.1} parent=15 // pred_check
          %p190 = pneg %p73
        $region22: #{tpu_custom_call.1} parent=15 // pred_check_branch
          %192 = sbr.rel (%p190) target = $region24
        $region23: #{tpu_custom_call.1} parent=15 // pred_region
          %p193 = scmp.lt.s32.totalorder %s20, 1
          %s194 = scalar_select %p193, %s20, 1
          %p195 = scmp.lt.s32.totalorder %s21, 1
          %s196 = scalar_select %p195, %s21, 1
          %s197 = smul.addr %s194, 2
          %s198 = sadd.s32 %s196, %s197
          %s199 = smul.addr %s198, 2
          %s200 = scalar_lea.vmem %s1, %s199
        $region24: #{tpu_custom_call.1} parent=15 // pred_fallthru
          _
        // Predicated region
        $region25: #{tpu_custom_call.1} parent=15 // pred_check
          %p201 = pneg %p101
        $region26: #{tpu_custom_call.1} parent=15 // pred_check_branch
          %203 = sbr.rel (%p201) target = $region28
        $region27: #{tpu_custom_call.1} parent=15 // pred_region
          %p204 = scmp.lt.s32.totalorder %s20, 1
          %s205 = scalar_select %p204, %s20, 1
          %p206 = scmp.lt.s32.totalorder %s21, 1
          %s207 = scalar_select %p206, %s21, 1
          %s208 = smul.addr %s205, 2
          %s209 = sadd.s32 %s207, %s208
          %s210 = scalar_lea.vmem %s2, %s209
        $region28: #{tpu_custom_call.1} parent=15 // pred_fallthru
          _
        // Predicated region
        $region29: #{tpu_custom_call.1} parent=15 // pred_check
          %p211 = pneg %p129
        $region30: #{tpu_custom_call.1} parent=15 // pred_check_branch
          %213 = sbr.rel (%p211) target = $region32
        $region31: #{tpu_custom_call.1} parent=15 // pred_region
          %p214 = scmp.lt.s32.totalorder %s20, 1
          %s215 = scalar_select %p214, %s20, 1
          %p216 = scmp.lt.s32.totalorder %s21, 1
          %s217 = scalar_select %p216, %s21, 1
          %s218 = smul.addr %s215, 2
          %s219 = sadd.s32 %s217, %s218
          %s220 = smul.addr %s219, 4
          %s221 = scalar_lea.vmem %s3, %s220
        $region32: #{tpu_custom_call.1} parent=15 // pred_fallthru
          _
      $region16: #{tpu_custom_call.1} parent=5 // pred_fallthru
        _
      %p222 = scmp.le.s32.totalorder 1, %s13
      %p223 = scmp.lt.s32.totalorder %s13, 5
      %p224 = pnand %p222, %p223
      %p225 = pneg %p224
      // Predicated region
      $region33: #{tpu_custom_call.1} parent=5 // pred_check
        _
      $region34: #{tpu_custom_call.1} parent=5 // pred_check_branch
        %227 = sbr.rel (%p224) target = $region36
      $region35: #{tpu_custom_call.1} parent=5 // pred_region
        %s228 = ssub.s32 %s13, 1
        %p229 = scmp.lt.s32.totalorder %s22, 1
        %s230 = scalar_select %p229, %s22, 1
        %s231 = smul.addr %s230, 2
        %s232 = smul.addr %s231, 8
        %s233 = scalar_lea.vmem %s0, %s232
        %p234 = pneg %p51
        %p235 = pneg %p48
        %p236 = scmp.lt.s32.totalorder %s22, 1
        %s237 = scalar_select %p236, %s22, 1
        %p238 = scmp.lt.s32.totalorder %s23, 1
        %s239 = scalar_select %p238, %s23, 1
        %s240 = smul.addr %s237, 2
        %s241 = sadd.s32 %s239, %s240
        %s242 = smul.addr %s241, 2
        %s243 = scalar_lea.vmem %s1, %s242
        %p244 = pneg %p79
        %p245 = pneg %p76
        %p246 = scmp.lt.s32.totalorder %s22, 1
        %s247 = scalar_select %p246, %s22, 1
        %p248 = scmp.lt.s32.totalorder %s23, 1
        %s249 = scalar_select %p248, %s23, 1
        %s250 = smul.addr %s247, 2
        %s251 = sadd.s32 %s249, %s250
        %s252 = scalar_lea.vmem %s2, %s251
        %p253 = pneg %p107
        %p254 = pneg %p104
        %p255 = scmp.lt.s32.totalorder %s22, 1
        %s256 = scalar_select %p255, %s22, 1
        %p257 = scmp.lt.s32.totalorder %s23, 1
        %s258 = scalar_select %p257, %s23, 1
        %s259 = smul.addr %s256, 2
        %s260 = sadd.s32 %s258, %s259
        %s261 = smul.addr %s260, 4
        %s262 = scalar_lea.vmem %s3, %s261
        %p263 = pneg %p135
        %p264 = pneg %p132
        %p265 = pneg %p163
        %p266 = pneg %p160
        %s267 = sand.u32 %s150, 1
        %s268 = scalar_lea.sflag [#allocation3], %s267
        %s269 = sand.u32 %s150, 1
        %s270 = smul.addr %s269, 4
        %s271 = scalar_lea.vmem [#allocation2], %s270
        %p272 = scmp.lt.s32.totalorder %s22, 1
        %s273 = scalar_select %p272, %s22, 1
        %s274 = smul.addr %s273, 2
        %s275 = smul.addr %s274, 8
        %s276 = scalar_lea.vmem %s0, %s275
        %p277 = scmp.lt.s32.totalorder %s22, 1
        %s278 = scalar_select %p277, %s22, 1
        %p279 = scmp.lt.s32.totalorder %s23, 1
        %s280 = scalar_select %p279, %s23, 1
        %s281 = smul.addr %s278, 2
        %s282 = sadd.s32 %s280, %s281
        %s283 = smul.addr %s282, 2
        %s284 = scalar_lea.vmem %s1, %s283
        %p285 = scmp.lt.s32.totalorder %s22, 1
        %s286 = scalar_select %p285, %s22, 1
        %p287 = scmp.lt.s32.totalorder %s23, 1
        %s288 = scalar_select %p287, %s23, 1
        %s289 = smul.addr %s286, 2
        %s290 = sadd.s32 %s288, %s289
        %s291 = scalar_lea.vmem %s2, %s290
        %p292 = scmp.lt.s32.totalorder %s22, 1
        %s293 = scalar_select %p292, %s22, 1
        %p294 = scmp.lt.s32.totalorder %s23, 1
        %s295 = scalar_select %p294, %s23, 1
        %s296 = smul.addr %s293, 2
        %s297 = sadd.s32 %s295, %s296
        %s298 = smul.addr %s297, 4
        %s299 = scalar_lea.vmem %s3, %s298
        %v300 = vld [vmem:[%s276] sm:$0xff]
        %v301 = vld [vmem:[%s276 + $0x8] sm:$0xf]
        %v302 = vld [vmem:[%s284] sm:$0x3]
        %v303 = vadd.f32 %v302, 1.0
        %v304 = vmul.f32 %v303, 16.0
        %v305 = vsub.f32 %v304, 1.0
        %v306 = vmul.f32 %v305, 0.5
        %v307 = vmul.f32 %v303, 12.0
        %v308 = vsub.f32 %v307, 1.0
        %v309 = vmul.f32 %v308, 0.5
        %v310 = vlaneseq
        %v311 = vshrl.u32 %v310, 7
        %v312 = vadd.s32 %v311, 8
        %v313 = vcvt.s32.f32 %v311
        %v314 = vcvt.s32.f32 %v312
        %v315 = vperm.slane %v306, 0
        %v316 = vsub.f32 %v313, %v315
        %v317 = vsub.f32 %v314, %v315
        %v318 = vand.u32 2147483647, %v316
        %v319 = vand.u32 2147483647, %v317
        %v320 = vsub.f32 1.0, %v318
        %v321 = vsub.f32 1.0, %v319
        %v322 = vmax.f32 %v320, 0.0
        %v323 = vmax.f32 %v321, 0.0
        %v324 = vperm.slane %v309, 1
        %v325 = vsub.f32 %v313, %v324
        %v326 = vsub.f32 %v314, %v324
        %v327 = vand.u32 2147483647, %v325
        %v328 = vand.u32 2147483647, %v326
        %v329 = vsub.f32 1.0, %v327
        %v330 = vsub.f32 1.0, %v328
        %v331 = vmax.f32 %v329, 0.0
        %v332 = vmax.f32 %v330, 0.0
        %vm333 = vcmask 130048
        %v335 = vsel %vm333, %v300, 0
        %v338 = vsel %vm333, %v301, 0
        %340 = vmatpush.msra.mxu0 0.0
        %341 = vmatpush.msra.mxu0 0.0
        %342 = vmatpush.msra.mxu0 0.0
        %343 = vmatpush.msra.mxu0 0.0
        %344 = vmatpush.msra.mxu0 0.0
        %345 = vmatpush.msra.mxu0 0.0
        %346 = vmatpush.msra.mxu0 0.0
        %347 = vmatpush.msra.mxu0 0.0
        %348 = vmatpush.msra.mxu0 0.0
        %349 = vmatpush.msra.mxu0 0.0
        %350 = vmatpush.msra.mxu0 0.0
        %351 = vmatpush.msra.mxu0 0.0
        %352 = vmatpush.msra.mxu0 0.0
        %353 = vmatpush.msra.mxu0 0.0
        %354 = vmatpush.msra.mxu0 %v323
        %355 = vmatpush.msra.mxu0 %v322
        %356 = vmatmul.f32.gmra.mxu0 %v335
        %v357 = vpop.f32.mrf.mxu0
        %v358 = vadd.f32 0.0, %v357
        %359 = vmatmul.f32.gmra.mxu0 %v338
        %v360 = vpop.f32.mrf.mxu0
        %v361 = vadd.f32 0.0, %v360
        %362 = vdwg.mxu0
        %v363 = vmul.f32 %v358, %v331
        %v364 = vmul.f32 %v361, %v332
        %vm365 = vcmask 1043456
        %v366 = vsel %vm365, %v364, 0.0
        %v367 = vadd.f32 %v363, %v366
        %v368 = vrot.slane %v367, 4
        %v369 = vadd.f32 %v367, %v368
        %v370 = vrot.slane %v369, 2
        %v371 = vadd.f32 %v369, %v370
        %v372 = vrot.slane %v371, 1
        %v373 = vadd.f32 %v371, %v372
        %v374 = vld [vmem:[%s291] sm:$0x1]
        %v375 = vadd.f32 %v373, %v374
        %vm376 = vcmp.gt.f32.partialorder %v375, -0.84729785
        %v377 = vsel %vm376, 1, 0
        %v378 = vcvt.s32.f32 %v377
        %v379 = vld [vmem:[%s299] sm:$0x7]
        %v380 = vmul.f32 %v379, %v379
        %v382 = vrot.slane %v380, 1
        %v384 = vadd.f32 %v380, %v382
        %v385 = vrot.slane %v380, 2
        %v387 = vadd.f32 %v384, %v385
        %v388 = vrsqrt.pop %v387
        %v389 = vmul.f32 %v388, %v387
        %v390 = vmul.f32 %v389, %v388
        %v391 = vmul.f32 0.5, %v390
        %v392 = vsub.f32 1.5, %v391
        %v393 = vmul.f32 %v388, %v392
        %v394 = vmul.f32 %v387, %v393
        %vm395 = vcmp.eq.f32.partialorder %v387, inf
        %v396 = vsel %vm395, %v387, %v394
        %vm397 = vcmp.eq.f32.partialorder %v387, 0.0
        %v398 = vand.u32 %v387, 2147483648
        %v399 = vsel %vm397, %v398, %v396
        %v401 = vrot.slane %v375, 7
        %v404 = vrot.slane %v378, 6
        %v407 = vrot.slane %v399, 5
        %vm409 = vcmask 1040384
        %v410 = vsel %vm409, %v373, %v401
        %vm411 = vcmask 1041408
        %v412 = vsel %vm411, %v410, %v404
        %vm413 = vcmask 1042432
        %v414 = vsel %vm413, %v412, %v407
        %415 = vst [vmem:[%s271] sm:$0xf] %v414
        %s416 = sand.u32 %s150, 1
        %s417 = scalar_lea.sflag [#allocation3], %s416
        %s418 = sand.u32 %s150, 1
        %s419 = smul.addr %s418, 4
        %s420 = scalar_lea.vmem [#allocation2], %s419
        // Predicated region
        $region37: #{tpu_custom_call.1} parent=35 // pred_check
          %p421 = pneg %p160
        $region38: #{tpu_custom_call.1} parent=35 // pred_check_branch
          %423 = sbr.rel (%p421) target = $region40
        $region39: #{tpu_custom_call.1} parent=35 // pred_region
          %425 = vsyncadd %s417, 0
          %s426 = smul.addr %s22, 2
          %s427 = sadd.s32 %s23, %s426
          %s428 = smul.addr %s427, 4
          %s429 = scalar_lea.hbm %s4, %s428
          %s431 = sshll.u32 %s420, 4
          %s432 = int_to_ptr.vmem [resolvable:$true] %s431
          %s433 = sshll.u32 %s429, 4
          %s434 = int_to_ptr.hbm [resolvable:$true] %s433
          %436 = dma.vmem_to_hbm [thread:$0]  %s432, 64, %s434, %s417
        $region40: #{tpu_custom_call.1} parent=35 // pred_fallthru
          _
      $region36: #{tpu_custom_call.1} parent=5 // pred_fallthru
        _
      %p437 = scmp.le.s32.totalorder 2, %s13
      // Predicated region
      $region41: #{tpu_custom_call.1} parent=5 // pred_check
        %p438 = pneg %p437
      $region42: #{tpu_custom_call.1} parent=5 // pred_check_branch
        %440 = sbr.rel (%p438) target = $region44
      $region43: #{tpu_custom_call.1} parent=5 // pred_region
        %s441 = ssub.s32 %s13, 2
        // Predicated region
        $region45: #{tpu_custom_call.1} parent=43 // pred_check
          %p442 = pneg %p166
        $region46: #{tpu_custom_call.1} parent=43 // pred_check_branch
          %444 = sbr.rel (%p442) target = $region48
        $region47: #{tpu_custom_call.1} parent=43 // pred_region
          %s445 = sand.u32 %s151, 1
          %s446 = scalar_lea.sflag [#allocation3], %s445
          %s447 = sand.u32 %s151, 1
          %s448 = smul.addr %s447, 4
          %s449 = scalar_lea.vmem [#allocation2], %s448
          %451 = dma.done %s446, 64
        $region48: #{tpu_custom_call.1} parent=43 // pred_fallthru
          _
      $region44: #{tpu_custom_call.1} parent=5 // pred_fallthru
        _
    $region6: #{tpu_custom_call.1} parent=1 // loop_footer
      %s17 = sadd.s32 1, %s13
    $region7: #{tpu_custom_call.1} parent=1 // loop_footer_branch
      %12 = sbr.rel target = $region3
    $region8: #{tpu_custom_call.1} parent=1 // loop_exit
      _
    %452 = vsyncpa [#allocation3], 1
    %s453 = scalar_lea.sflag [#allocation3], 1
    %454 = vsyncpa %s453, 1

</llo_original>
